<compile_context>
chip_gen: v7x
topology: tpu7x:2x2x1
jax: 0.10.0
libtpu: 0.0.40
codegen_flags: <defaults>
</compile_context>

<pallas_src>
import jax
import jax.numpy as jnp
from jax.experimental import pallas as pl
from jax.experimental.pallas import tpu as pltpu


def qmeasurement_kernel(krT_ref, kiT_ref, xr_ref, xi_ref, out_ref,
                        pr_ref, pi_ref):
    """Fused QMeasurement forward.

    krT_ref, kiT_ref : (E, E) f32   transposed Re/Im kernel params, krT[a, i] = kr[i, a]
    xr_ref, xi_ref   : (tb, E*E)    real/imag parts of the flattened inputs (batch tile)
    out_ref          : (tb, E) f32
    pr_ref, pi_ref   : (E*E, E)     VMEM scratch holding Re(P)^T / Im(P)^T (persists
                                    across grid steps; built once at step 0)
    """
    E = out_ref.shape[-1]

    @pl.when(pl.program_id(0) == 0)
    def _build_projector():
        # Build Re(P)^T and Im(P)^T once, in f32, directly in VMEM.
        #   ProjR[i, a, c] = kr[i,a]*kr[i,c] + ki[i,a]*ki[i,c]
        #   ProjI[i, a, c] = ki[i,a]*kr[i,c] - kr[i,a]*ki[i,c]
        # stored at row flat = a*E + c, column i.
        krT = krT_ref[...]            # (E, E): krT[a, i] = kr[i, a]
        kiT = kiT_ref[...]
        for a in range(E):            # one-time, unrolled at trace time
            kra = krT[a:a + 1, :]     # (1, E), sublane-broadcasts against (E, E)
            kia = kiT[a:a + 1, :]
            pr_ref[pl.ds(a * E, E), :] = (kra * krT + kia * kiT).astype(pr_ref.dtype)
            pi_ref[pl.ds(a * E, E), :] = (kia * krT - kra * kiT).astype(pi_ref.dtype)

    # out = Re(X) @ Re(P)^T + Im(X) @ Im(P)^T   (two MXU dots, f32 accumulation)
    acc = jnp.dot(xr_ref[...], pr_ref[...], preferred_element_type=jnp.float32)
    acc = acc + jnp.dot(xi_ref[...], pi_ref[...], preferred_element_type=jnp.float32)
    out_ref[...] = acc.astype(out_ref.dtype)


def qmeasurement_forward(x_real, x_imag, kernel_unitary, *,
                         batch_tile=None, input_dtype=None):
    """JAX wrapper around the Pallas kernel.

    x_real, x_imag : (B, E, E) float32 (real/imag parts of the complex input)
    kernel_unitary : (E, E, 2) float32 (the module parameter)
    returns        : (B, E) float32
    """
    B, E, _ = x_real.shape
    K = E * E

    if input_dtype is None:
        # Large-E/B runs are HBM-bound streaming X -> default to bf16 there.
        input_dtype = jnp.float32 if K <= 4096 else jnp.bfloat16
    in_bytes = jnp.dtype(input_dtype).itemsize

    # ---- tile sizing from a conservative VMEM budget (fits v7x 64 MiB) ----
    if batch_tile is None:
        budget = 40 * 1024 * 1024
        fixed = 2 * K * E * in_bytes                    # projector scratch (single copy)
        per_row = 2 * 2 * K * in_bytes + 2 * E * 4      # xr+xi double-buffered + out
        avail = max(budget - fixed, per_row * 8)
        batch_tile = int(avail // per_row)
        batch_tile = max(8, min(batch_tile, 512))
        batch_tile -= batch_tile % 8
        if batch_tile >= B:
            batch_tile = B                              # whole (small) batch in one tile
    if batch_tile < B and batch_tile % 8 != 0:
        raise ValueError("batch_tile must be a multiple of 8 when it does not "
                         "cover the whole batch")

    n_tiles = pl.cdiv(B, batch_tile)
    B_pad = n_tiles * batch_tile

    # ---- glue: contiguous reshapes only (no HBM repack of the big operands) ----
    xr = x_real.reshape(B, K).astype(input_dtype)
    xi = x_imag.reshape(B, K).astype(input_dtype)
    if B_pad != B:
        pad = ((0, B_pad - B), (0, 0))
        xr = jnp.pad(xr, pad)
        xi = jnp.pad(xi, pad)

    # Tiny (E^2) parameter transposes so the kernel needs no in-kernel transpose.
    krT = kernel_unitary[:, :, 0].T.astype(jnp.float32)
    kiT = kernel_unitary[:, :, 1].T.astype(jnp.float32)

    working = (2 * K * E * in_bytes                     # projector scratch
               + 2 * 2 * batch_tile * K * in_bytes      # double-buffered xr/xi tiles
               + 2 * batch_tile * E * 4                 # double-buffered out tile
               + 2 * 2 * E * E * 4)                     # krT/kiT
    vmem_limit = int(max(working + (4 << 20), 32 << 20))

    out = pl.pallas_call(
        qmeasurement_kernel,
        out_shape=jax.ShapeDtypeStruct((B_pad, E), jnp.float32),
        grid=(n_tiles,),
        in_specs=[
            pl.BlockSpec((E, E), lambda i: (0, 0)),             # krT (grid-invariant)
            pl.BlockSpec((E, E), lambda i: (0, 0)),             # kiT (grid-invariant)
            pl.BlockSpec((batch_tile, K), lambda i: (i, 0)),    # Re(X) tile
            pl.BlockSpec((batch_tile, K), lambda i: (i, 0)),    # Im(X) tile
        ],
        out_specs=pl.BlockSpec((batch_tile, E), lambda i: (i, 0)),
        scratch_shapes=[
            pltpu.VMEM((K, E), input_dtype),                    # Re(P)^T, single copy
            pltpu.VMEM((K, E), input_dtype),                    # Im(P)^T, single copy
        ],
        compiler_params=pltpu.CompilerParams(
            # Sequential batch axis so the step-0 projector build is reused.
            dimension_semantics=("arbitrary",),
            vmem_limit_bytes=vmem_limit),
        cost_estimate=pl.CostEstimate(
            flops=4 * B_pad * K * E,
            transcendentals=0,
            bytes_accessed=int(2 * B_pad * K * in_bytes + 4 * E * E * 4
                               + B_pad * E * 4)),
    )(krT, kiT, xr, xi)
    return out[:B]


def qmeasurement_reference(x_real, x_imag, kernel_unitary):
    """Pure-JAX transcription of the PyTorch forward (for validation)."""
    E = kernel_unitary.shape[0]
    kr = kernel_unitary[:, :, 0]
    ki = kernel_unitary[:, :, 1]
    kern = (kr + 1j * ki).astype(jnp.complex64)
    projector = kern[:, :, None] * jnp.conj(kern)[:, None, :]
    x = (x_real + 1j * x_imag).astype(jnp.complex64)
    B = x.shape[0]
    xf = x.reshape(B, E * E)
    pf = projector.reshape(E, E * E)
    result = jnp.real(xf @ pf.T)
    result_bu = x_imag.reshape(B, E * E) @ jnp.imag(projector).reshape(E, E * E).T
    return result + 2.0 * result_bu


if __name__ == "__main__":
    E = 16      # embed_dim
    B = 16      # batch of density-matrix-like inputs, shape (B, E, E)

    key = jax.random.PRNGKey(0)
    k_xr, k_xi, k_pert = jax.random.split(key, 3)
    x_real = jax.random.normal(k_xr, (B, E, E), dtype=jnp.float32)
    x_imag = jax.random.normal(k_xi, (B, E, E), dtype=jnp.float32)

    # Parameter initialized exactly as the module's __init__: stack([eye, zeros], -1)
    kernel_unitary = jnp.stack(
        [jnp.eye(E, dtype=jnp.float32), jnp.zeros((E, E), dtype=jnp.float32)],
        axis=-1,
    )

    out = jax.block_until_ready(qmeasurement_forward(x_real, x_imag, kernel_unitary))
    ref = qmeasurement_reference(x_real, x_imag, kernel_unitary)
    assert out.shape == (B, E)
    assert jnp.allclose(out, ref, atol=1e-4, rtol=1e-4)

    # Non-trivial unitary so the imaginary-projector path is exercised.
    kernel_unitary2 = kernel_unitary + 0.1 * jax.random.normal(
        k_pert, (E, E, 2), dtype=jnp.float32)
    out2 = jax.block_until_ready(
        qmeasurement_forward(x_real, x_imag, kernel_unitary2))
    ref2 = qmeasurement_reference(x_real, x_imag, kernel_unitary2)
    assert jnp.allclose(out2, ref2, atol=1e-3, rtol=1e-3)

    # Ragged batch + multi-step grid: exercises zero-padding and the
    # build-once / reuse-across-grid-steps projector scratch.
    out3 = jax.block_until_ready(
        qmeasurement_forward(x_real[:12], x_imag[:12], kernel_unitary2,
                             batch_tile=8))
    ref3 = qmeasurement_reference(x_real[:12], x_imag[:12], kernel_unitary2)
    assert out3.shape == (12, E)
    assert jnp.allclose(out3, ref3, atol=1e-3, rtol=1e-3)

    # Optional bf16 fast path (f32 projector build + f32 accumulation).
    out4 = jax.block_until_ready(
        qmeasurement_forward(x_real, x_imag, kernel_unitary2,
                             input_dtype=jnp.bfloat16))
    assert jnp.allclose(out4, ref2, atol=0.5, rtol=5e-2)

    print("KERNEL_OK")
</pallas_src>

<mosaic_0001>
module attributes {stable_mosaic.version = 11 : i64} {
  func.func @qmeasurement_kernel(%arg0: i32, %arg1: memref<16x16xf32, #tpu.memory_space<vmem>>, %arg2: memref<16x16xf32, #tpu.memory_space<vmem>>, %arg3: memref<16x256xf32, #tpu.memory_space<vmem>>, %arg4: memref<16x256xf32, #tpu.memory_space<vmem>>, %arg5: memref<16x16xf32, #tpu.memory_space<vmem>>, %arg6: memref<256x16xf32, #tpu.memory_space<vmem>>, %arg7: memref<256x16xf32, #tpu.memory_space<vmem>>) attributes {dimension_semantics = [#tpu.dimension_semantics<arbitrary>], iteration_bounds = array<i64: 1>, scalar_prefetch = 0 : i64, scratch_operands = 2 : i64, tpu.core_type = #tpu.core_type<tc>, window_params = [{pipeline_mode = #tpu.pipeline_mode<synchronous>, transform_indices = @transform_0, window_bounds = array<i64: 16, 16>}, {pipeline_mode = #tpu.pipeline_mode<synchronous>, transform_indices = @transform_1, window_bounds = array<i64: 16, 16>}, {transform_indices = @transform_2, window_bounds = array<i64: 16, 256>}, {transform_indices = @transform_3, window_bounds = array<i64: 16, 256>}, {transform_indices = @transform_4, window_bounds = array<i64: 16, 16>}]} {
    %c0_i32 = arith.constant 0 : i32
    %0 = arith.cmpi eq, %arg0, %c0_i32 : i32
    %1 = arith.extui %0 : i1 to i32
    %c0_i32_0 = arith.constant 0 : i32
    %2 = arith.cmpi ne, %1, %c0_i32_0 : i32
    scf.if %2 {
      %c0_11 = arith.constant 0 : index
      %c0_12 = arith.constant 0 : index
      %11 = vector.load %arg1[%c0_11, %c0_12] : memref<16x16xf32, #tpu.memory_space<vmem>>, vector<16x16xf32>
      %c0_13 = arith.constant 0 : index
      %c0_14 = arith.constant 0 : index
      %12 = vector.load %arg2[%c0_13, %c0_14] : memref<16x16xf32, #tpu.memory_space<vmem>>, vector<16x16xf32>
      %13 = vector.extract_strided_slice %11 {offsets = [0, 0], sizes = [1, 16], strides = [1, 1]} : vector<16x16xf32> to vector<1x16xf32>
      %14 = vector.extract_strided_slice %12 {offsets = [0, 0], sizes = [1, 16], strides = [1, 1]} : vector<16x16xf32> to vector<1x16xf32>
      %15 = vector.broadcast %13 : vector<1x16xf32> to vector<16x16xf32>
      %16 = arith.mulf %15, %11 : vector<16x16xf32>
      %17 = vector.broadcast %14 : vector<1x16xf32> to vector<16x16xf32>
      %18 = arith.mulf %17, %12 : vector<16x16xf32>
      %19 = arith.addf %16, %18 : vector<16x16xf32>
      %c0_15 = arith.constant 0 : index
      %c0_16 = arith.constant 0 : index
      %20 = vector.load %arg6[%c0_15, %c0_16] : memref<256x16xf32, #tpu.memory_space<vmem>>, vector<16x16xf32>
      tpu.vector_store %arg6[%c0_15, %c0_16], %19 {strides = array<i32>} : memref<256x16xf32, #tpu.memory_space<vmem>>, vector<16x16xf32>,
      %21 = vector.broadcast %14 : vector<1x16xf32> to vector<16x16xf32>
      %22 = arith.mulf %21, %11 : vector<16x16xf32>
      %23 = vector.broadcast %13 : vector<1x16xf32> to vector<16x16xf32>
      %24 = arith.mulf %23, %12 : vector<16x16xf32>
      %25 = arith.subf %22, %24 : vector<16x16xf32>
      %c0_17 = arith.constant 0 : index
      %c0_18 = arith.constant 0 : index
      %26 = vector.load %arg7[%c0_17, %c0_18] : memref<256x16xf32, #tpu.memory_space<vmem>>, vector<16x16xf32>
      tpu.vector_store %arg7[%c0_17, %c0_18], %25 {strides = array<i32>} : memref<256x16xf32, #tpu.memory_space<vmem>>, vector<16x16xf32>,
      %27 = vector.extract_strided_slice %11 {offsets = [1, 0], sizes = [1, 16], strides = [1, 1]} : vector<16x16xf32> to vector<1x16xf32>
      %28 = vector.extract_strided_slice %12 {offsets = [1, 0], sizes = [1, 16], strides = [1, 1]} : vector<16x16xf32> to vector<1x16xf32>
      %29 = vector.broadcast %27 : vector<1x16xf32> to vector<16x16xf32>
      %30 = arith.mulf %29, %11 : vector<16x16xf32>
      %31 = vector.broadcast %28 : vector<1x16xf32> to vector<16x16xf32>
      %32 = arith.mulf %31, %12 : vector<16x16xf32>
      %33 = arith.addf %30, %32 : vector<16x16xf32>
      %c16 = arith.constant 16 : index
      %c0_19 = arith.constant 0 : index
      %34 = vector.load %arg6[%c16, %c0_19] : memref<256x16xf32, #tpu.memory_space<vmem>>, vector<16x16xf32>
      tpu.vector_store %arg6[%c16, %c0_19], %33 {strides = array<i32>} : memref<256x16xf32, #tpu.memory_space<vmem>>, vector<16x16xf32>,
      %35 = vector.broadcast %28 : vector<1x16xf32> to vector<16x16xf32>
      %36 = arith.mulf %35, %11 : vector<16x16xf32>
      %37 = vector.broadcast %27 : vector<1x16xf32> to vector<16x16xf32>
      %38 = arith.mulf %37, %12 : vector<16x16xf32>
      %39 = arith.subf %36, %38 : vector<16x16xf32>
      %c16_20 = arith.constant 16 : index
      %c0_21 = arith.constant 0 : index
      %40 = vector.load %arg7[%c16_20, %c0_21] : memref<256x16xf32, #tpu.memory_space<vmem>>, vector<16x16xf32>
      tpu.vector_store %arg7[%c16_20, %c0_21], %39 {strides = array<i32>} : memref<256x16xf32, #tpu.memory_space<vmem>>, vector<16x16xf32>,
      %41 = vector.extract_strided_slice %11 {offsets = [2, 0], sizes = [1, 16], strides = [1, 1]} : vector<16x16xf32> to vector<1x16xf32>
      %42 = vector.extract_strided_slice %12 {offsets = [2, 0], sizes = [1, 16], strides = [1, 1]} : vector<16x16xf32> to vector<1x16xf32>
      %43 = vector.broadcast %41 : vector<1x16xf32> to vector<16x16xf32>
      %44 = arith.mulf %43, %11 : vector<16x16xf32>
      %45 = vector.broadcast %42 : vector<1x16xf32> to vector<16x16xf32>
      %46 = arith.mulf %45, %12 : vector<16x16xf32>
      %47 = arith.addf %44, %46 : vector<16x16xf32>
      %c32 = arith.constant 32 : index
      %c0_22 = arith.constant 0 : index
      %48 = vector.load %arg6[%c32, %c0_22] : memref<256x16xf32, #tpu.memory_space<vmem>>, vector<16x16xf32>
      tpu.vector_store %arg6[%c32, %c0_22], %47 {strides = array<i32>} : memref<256x16xf32, #tpu.memory_space<vmem>>, vector<16x16xf32>,
      %49 = vector.broadcast %42 : vector<1x16xf32> to vector<16x16xf32>
      %50 = arith.mulf %49, %11 : vector<16x16xf32>
      %51 = vector.broadcast %41 : vector<1x16xf32> to vector<16x16xf32>
      %52 = arith.mulf %51, %12 : vector<16x16xf32>
      %53 = arith.subf %50, %52 : vector<16x16xf32>
      %c32_23 = arith.constant 32 : index
      %c0_24 = arith.constant 0 : index
      %54 = vector.load %arg7[%c32_23, %c0_24] : memref<256x16xf32, #tpu.memory_space<vmem>>, vector<16x16xf32>
      tpu.vector_store %arg7[%c32_23, %c0_24], %53 {strides = array<i32>} : memref<256x16xf32, #tpu.memory_space<vmem>>, vector<16x16xf32>,
      %55 = vector.extract_strided_slice %11 {offsets = [3, 0], sizes = [1, 16], strides = [1, 1]} : vector<16x16xf32> to vector<1x16xf32>
      %56 = vector.extract_strided_slice %12 {offsets = [3, 0], sizes = [1, 16], strides = [1, 1]} : vector<16x16xf32> to vector<1x16xf32>
      %57 = vector.broadcast %55 : vector<1x16xf32> to vector<16x16xf32>
      %58 = arith.mulf %57, %11 : vector<16x16xf32>
      %59 = vector.broadcast %56 : vector<1x16xf32> to vector<16x16xf32>
      %60 = arith.mulf %59, %12 : vector<16x16xf32>
      %61 = arith.addf %58, %60 : vector<16x16xf32>
      %c48 = arith.constant 48 : index
      %c0_25 = arith.constant 0 : index
      %62 = vector.load %arg6[%c48, %c0_25] : memref<256x16xf32, #tpu.memory_space<vmem>>, vector<16x16xf32>
      tpu.vector_store %arg6[%c48, %c0_25], %61 {strides = array<i32>} : memref<256x16xf32, #tpu.memory_space<vmem>>, vector<16x16xf32>,
      %63 = vector.broadcast %56 : vector<1x16xf32> to vector<16x16xf32>
      %64 = arith.mulf %63, %11 : vector<16x16xf32>
      %65 = vector.broadcast %55 : vector<1x16xf32> to vector<16x16xf32>
      %66 = arith.mulf %65, %12 : vector<16x16xf32>
      %67 = arith.subf %64, %66 : vector<16x16xf32>
      %c48_26 = arith.constant 48 : index
      %c0_27 = arith.constant 0 : index
      %68 = vector.load %arg7[%c48_26, %c0_27] : memref<256x16xf32, #tpu.memory_space<vmem>>, vector<16x16xf32>
      tpu.vector_store %arg7[%c48_26, %c0_27], %67 {strides = array<i32>} : memref<256x16xf32, #tpu.memory_space<vmem>>, vector<16x16xf32>,
      %69 = vector.extract_strided_slice %11 {offsets = [4, 0], sizes = [1, 16], strides = [1, 1]} : vector<16x16xf32> to vector<1x16xf32>
      %70 = vector.extract_strided_slice %12 {offsets = [4, 0], sizes = [1, 16], strides = [1, 1]} : vector<16x16xf32> to vector<1x16xf32>
      %71 = vector.broadcast %69 : vector<1x16xf32> to vector<16x16xf32>
      %72 = arith.mulf %71, %11 : vector<16x16xf32>
      %73 = vector.broadcast %70 : vector<1x16xf32> to vector<16x16xf32>
      %74 = arith.mulf %73, %12 : vector<16x16xf32>
      %75 = arith.addf %72, %74 : vector<16x16xf32>
      %c64 = arith.constant 64 : index
      %c0_28 = arith.constant 0 : index
      %76 = vector.load %arg6[%c64, %c0_28] : memref<256x16xf32, #tpu.memory_space<vmem>>, vector<16x16xf32>
      tpu.vector_store %arg6[%c64, %c0_28], %75 {strides = array<i32>} : memref<256x16xf32, #tpu.memory_space<vmem>>, vector<16x16xf32>,
      %77 = vector.broadcast %70 : vector<1x16xf32> to vector<16x16xf32>
      %78 = arith.mulf %77, %11 : vector<16x16xf32>
      %79 = vector.broadcast %69 : vector<1x16xf32> to vector<16x16xf32>
      %80 = arith.mulf %79, %12 : vector<16x16xf32>
      %81 = arith.subf %78, %80 : vector<16x16xf32>
      %c64_29 = arith.constant 64 : index
      %c0_30 = arith.constant 0 : index
      %82 = vector.load %arg7[%c64_29, %c0_30] : memref<256x16xf32, #tpu.memory_space<vmem>>, vector<16x16xf32>
      tpu.vector_store %arg7[%c64_29, %c0_30], %81 {strides = array<i32>} : memref<256x16xf32, #tpu.memory_space<vmem>>, vector<16x16xf32>,
      %83 = vector.extract_strided_slice %11 {offsets = [5, 0], sizes = [1, 16], strides = [1, 1]} : vector<16x16xf32> to vector<1x16xf32>
      %84 = vector.extract_strided_slice %12 {offsets = [5, 0], sizes = [1, 16], strides = [1, 1]} : vector<16x16xf32> to vector<1x16xf32>
      %85 = vector.broadcast %83 : vector<1x16xf32> to vector<16x16xf32>
      %86 = arith.mulf %85, %11 : vector<16x16xf32>
      %87 = vector.broadcast %84 : vector<1x16xf32> to vector<16x16xf32>
      %88 = arith.mulf %87, %12 : vector<16x16xf32>
      %89 = arith.addf %86, %88 : vector<16x16xf32>
      %c80 = arith.constant 80 : index
      %c0_31 = arith.constant 0 : index
      %90 = vector.load %arg6[%c80, %c0_31] : memref<256x16xf32, #tpu.memory_space<vmem>>, vector<16x16xf32>
      tpu.vector_store %arg6[%c80, %c0_31], %89 {strides = array<i32>} : memref<256x16xf32, #tpu.memory_space<vmem>>, vector<16x16xf32>,
      %91 = vector.broadcast %84 : vector<1x16xf32> to vector<16x16xf32>
      %92 = arith.mulf %91, %11 : vector<16x16xf32>
      %93 = vector.broadcast %83 : vector<1x16xf32> to vector<16x16xf32>
      %94 = arith.mulf %93, %12 : vector<16x16xf32>
      %95 = arith.subf %92, %94 : vector<16x16xf32>
      %c80_32 = arith.constant 80 : index
      %c0_33 = arith.constant 0 : index
      %96 = vector.load %arg7[%c80_32, %c0_33] : memref<256x16xf32, #tpu.memory_space<vmem>>, vector<16x16xf32>
      tpu.vector_store %arg7[%c80_32, %c0_33], %95 {strides = array<i32>} : memref<256x16xf32, #tpu.memory_space<vmem>>, vector<16x16xf32>,
      %97 = vector.extract_strided_slice %11 {offsets = [6, 0], sizes = [1, 16], strides = [1, 1]} : vector<16x16xf32> to vector<1x16xf32>
      %98 = vector.extract_strided_slice %12 {offsets = [6, 0], sizes = [1, 16], strides = [1, 1]} : vector<16x16xf32> to vector<1x16xf32>
      %99 = vector.broadcast %97 : vector<1x16xf32> to vector<16x16xf32>
      %100 = arith.mulf %99, %11 : vector<16x16xf32>
      %101 = vector.broadcast %98 : vector<1x16xf32> to vector<16x16xf32>
      %102 = arith.mulf %101, %12 : vector<16x16xf32>
      %103 = arith.addf %100, %102 : vector<16x16xf32>
      %c96 = arith.constant 96 : index
      %c0_34 = arith.constant 0 : index
      %104 = vector.load %arg6[%c96, %c0_34] : memref<256x16xf32, #tpu.memory_space<vmem>>, vector<16x16xf32>
      tpu.vector_store %arg6[%c96, %c0_34], %103 {strides = array<i32>} : memref<256x16xf32, #tpu.memory_space<vmem>>, vector<16x16xf32>,
      %105 = vector.broadcast %98 : vector<1x16xf32> to vector<16x16xf32>
      %106 = arith.mulf %105, %11 : vector<16x16xf32>
      %107 = vector.broadcast %97 : vector<1x16xf32> to vector<16x16xf32>
      %108 = arith.mulf %107, %12 : vector<16x16xf32>
      %109 = arith.subf %106, %108 : vector<16x16xf32>
      %c96_35 = arith.constant 96 : index
      %c0_36 = arith.constant 0 : index
      %110 = vector.load %arg7[%c96_35, %c0_36] : memref<256x16xf32, #tpu.memory_space<vmem>>, vector<16x16xf32>
      tpu.vector_store %arg7[%c96_35, %c0_36], %109 {strides = array<i32>} : memref<256x16xf32, #tpu.memory_space<vmem>>, vector<16x16xf32>,
      %111 = vector.extract_strided_slice %11 {offsets = [7, 0], sizes = [1, 16], strides = [1, 1]} : vector<16x16xf32> to vector<1x16xf32>
      %112 = vector.extract_strided_slice %12 {offsets = [7, 0], sizes = [1, 16], strides = [1, 1]} : vector<16x16xf32> to vector<1x16xf32>
      %113 = vector.broadcast %111 : vector<1x16xf32> to vector<16x16xf32>
      %114 = arith.mulf %113, %11 : vector<16x16xf32>
      %115 = vector.broadcast %112 : vector<1x16xf32> to vector<16x16xf32>
      %116 = arith.mulf %115, %12 : vector<16x16xf32>
      %117 = arith.addf %114, %116 : vector<16x16xf32>
      %c112 = arith.constant 112 : index
      %c0_37 = arith.constant 0 : index
      %118 = vector.load %arg6[%c112, %c0_37] : memref<256x16xf32, #tpu.memory_space<vmem>>, vector<16x16xf32>
      tpu.vector_store %arg6[%c112, %c0_37], %117 {strides = array<i32>} : memref<256x16xf32, #tpu.memory_space<vmem>>, vector<16x16xf32>,
      %119 = vector.broadcast %112 : vector<1x16xf32> to vector<16x16xf32>
      %120 = arith.mulf %119, %11 : vector<16x16xf32>
      %121 = vector.broadcast %111 : vector<1x16xf32> to vector<16x16xf32>
      %122 = arith.mulf %121, %12 : vector<16x16xf32>
      %123 = arith.subf %120, %122 : vector<16x16xf32>
      %c112_38 = arith.constant 112 : index
      %c0_39 = arith.constant 0 : index
      %124 = vector.load %arg7[%c112_38, %c0_39] : memref<256x16xf32, #tpu.memory_space<vmem>>, vector<16x16xf32>
      tpu.vector_store %arg7[%c112_38, %c0_39], %123 {strides = array<i32>} : memref<256x16xf32, #tpu.memory_space<vmem>>, vector<16x16xf32>,
      %125 = vector.extract_strided_slice %11 {offsets = [8, 0], sizes = [1, 16], strides = [1, 1]} : vector<16x16xf32> to vector<1x16xf32>
      %126 = vector.extract_strided_slice %12 {offsets = [8, 0], sizes = [1, 16], strides = [1, 1]} : vector<16x16xf32> to vector<1x16xf32>
      %127 = vector.broadcast %125 : vector<1x16xf32> to vector<16x16xf32>
      %128 = arith.mulf %127, %11 : vector<16x16xf32>
      %129 = vector.broadcast %126 : vector<1x16xf32> to vector<16x16xf32>
      %130 = arith.mulf %129, %12 : vector<16x16xf32>
      %131 = arith.addf %128, %130 : vector<16x16xf32>
      %c128 = arith.constant 128 : index
      %c0_40 = arith.constant 0 : index
      %132 = vector.load %arg6[%c128, %c0_40] : memref<256x16xf32, #tpu.memory_space<vmem>>, vector<16x16xf32>
      tpu.vector_store %arg6[%c128, %c0_40], %131 {strides = array<i32>} : memref<256x16xf32, #tpu.memory_space<vmem>>, vector<16x16xf32>,
      %133 = vector.broadcast %126 : vector<1x16xf32> to vector<16x16xf32>
      %134 = arith.mulf %133, %11 : vector<16x16xf32>
      %135 = vector.broadcast %125 : vector<1x16xf32> to vector<16x16xf32>
      %136 = arith.mulf %135, %12 : vector<16x16xf32>
      %137 = arith.subf %134, %136 : vector<16x16xf32>
      %c128_41 = arith.constant 128 : index
      %c0_42 = arith.constant 0 : index
      %138 = vector.load %arg7[%c128_41, %c0_42] : memref<256x16xf32, #tpu.memory_space<vmem>>, vector<16x16xf32>
      tpu.vector_store %arg7[%c128_41, %c0_42], %137 {strides = array<i32>} : memref<256x16xf32, #tpu.memory_space<vmem>>, vector<16x16xf32>,
      %139 = vector.extract_strided_slice %11 {offsets = [9, 0], sizes = [1, 16], strides = [1, 1]} : vector<16x16xf32> to vector<1x16xf32>
      %140 = vector.extract_strided_slice %12 {offsets = [9, 0], sizes = [1, 16], strides = [1, 1]} : vector<16x16xf32> to vector<1x16xf32>
      %141 = vector.broadcast %139 : vector<1x16xf32> to vector<16x16xf32>
      %142 = arith.mulf %141, %11 : vector<16x16xf32>
      %143 = vector.broadcast %140 : vector<1x16xf32> to vector<16x16xf32>
      %144 = arith.mulf %143, %12 : vector<16x16xf32>
      %145 = arith.addf %142, %144 : vector<16x16xf32>
      %c144 = arith.constant 144 : index
      %c0_43 = arith.constant 0 : index
      %146 = vector.load %arg6[%c144, %c0_43] : memref<256x16xf32, #tpu.memory_space<vmem>>, vector<16x16xf32>
      tpu.vector_store %arg6[%c144, %c0_43], %145 {strides = array<i32>} : memref<256x16xf32, #tpu.memory_space<vmem>>, vector<16x16xf32>,
      %147 = vector.broadcast %140 : vector<1x16xf32> to vector<16x16xf32>
      %148 = arith.mulf %147, %11 : vector<16x16xf32>
      %149 = vector.broadcast %139 : vector<1x16xf32> to vector<16x16xf32>
      %150 = arith.mulf %149, %12 : vector<16x16xf32>
      %151 = arith.subf %148, %150 : vector<16x16xf32>
      %c144_44 = arith.constant 144 : index
      %c0_45 = arith.constant 0 : index
      %152 = vector.load %arg7[%c144_44, %c0_45] : memref<256x16xf32, #tpu.memory_space<vmem>>, vector<16x16xf32>
      tpu.vector_store %arg7[%c144_44, %c0_45], %151 {strides = array<i32>} : memref<256x16xf32, #tpu.memory_space<vmem>>, vector<16x16xf32>,
      %153 = vector.extract_strided_slice %11 {offsets = [10, 0], sizes = [1, 16], strides = [1, 1]} : vector<16x16xf32> to vector<1x16xf32>
      %154 = vector.extract_strided_slice %12 {offsets = [10, 0], sizes = [1, 16], strides = [1, 1]} : vector<16x16xf32> to vector<1x16xf32>
      %155 = vector.broadcast %153 : vector<1x16xf32> to vector<16x16xf32>
      %156 = arith.mulf %155, %11 : vector<16x16xf32>
      %157 = vector.broadcast %154 : vector<1x16xf32> to vector<16x16xf32>
      %158 = arith.mulf %157, %12 : vector<16x16xf32>
      %159 = arith.addf %156, %158 : vector<16x16xf32>
      %c160 = arith.constant 160 : index
      %c0_46 = arith.constant 0 : index
      %160 = vector.load %arg6[%c160, %c0_46] : memref<256x16xf32, #tpu.memory_space<vmem>>, vector<16x16xf32>
      tpu.vector_store %arg6[%c160, %c0_46], %159 {strides = array<i32>} : memref<256x16xf32, #tpu.memory_space<vmem>>, vector<16x16xf32>,
      %161 = vector.broadcast %154 : vector<1x16xf32> to vector<16x16xf32>
      %162 = arith.mulf %161, %11 : vector<16x16xf32>
      %163 = vector.broadcast %153 : vector<1x16xf32> to vector<16x16xf32>
      %164 = arith.mulf %163, %12 : vector<16x16xf32>
      %165 = arith.subf %162, %164 : vector<16x16xf32>
      %c160_47 = arith.constant 160 : index
      %c0_48 = arith.constant 0 : index
      %166 = vector.load %arg7[%c160_47, %c0_48] : memref<256x16xf32, #tpu.memory_space<vmem>>, vector<16x16xf32>
      tpu.vector_store %arg7[%c160_47, %c0_48], %165 {strides = array<i32>} : memref<256x16xf32, #tpu.memory_space<vmem>>, vector<16x16xf32>,
      %167 = vector.extract_strided_slice %11 {offsets = [11, 0], sizes = [1, 16], strides = [1, 1]} : vector<16x16xf32> to vector<1x16xf32>
      %168 = vector.extract_strided_slice %12 {offsets = [11, 0], sizes = [1, 16], strides = [1, 1]} : vector<16x16xf32> to vector<1x16xf32>
      %169 = vector.broadcast %167 : vector<1x16xf32> to vector<16x16xf32>
      %170 = arith.mulf %169, %11 : vector<16x16xf32>
      %171 = vector.broadcast %168 : vector<1x16xf32> to vector<16x16xf32>
      %172 = arith.mulf %171, %12 : vector<16x16xf32>
      %173 = arith.addf %170, %172 : vector<16x16xf32>
      %c176 = arith.constant 176 : index
      %c0_49 = arith.constant 0 : index
      %174 = vector.load %arg6[%c176, %c0_49] : memref<256x16xf32, #tpu.memory_space<vmem>>, vector<16x16xf32>
      tpu.vector_store %arg6[%c176, %c0_49], %173 {strides = array<i32>} : memref<256x16xf32, #tpu.memory_space<vmem>>, vector<16x16xf32>,
      %175 = vector.broadcast %168 : vector<1x16xf32> to vector<16x16xf32>
      %176 = arith.mulf %175, %11 : vector<16x16xf32>
      %177 = vector.broadcast %167 : vector<1x16xf32> to vector<16x16xf32>
      %178 = arith.mulf %177, %12 : vector<16x16xf32>
      %179 = arith.subf %176, %178 : vector<16x16xf32>
      %c176_50 = arith.constant 176 : index
      %c0_51 = arith.constant 0 : index
      %180 = vector.load %arg7[%c176_50, %c0_51] : memref<256x16xf32, #tpu.memory_space<vmem>>, vector<16x16xf32>
      tpu.vector_store %arg7[%c176_50, %c0_51], %179 {strides = array<i32>} : memref<256x16xf32, #tpu.memory_space<vmem>>, vector<16x16xf32>,
      %181 = vector.extract_strided_slice %11 {offsets = [12, 0], sizes = [1, 16], strides = [1, 1]} : vector<16x16xf32> to vector<1x16xf32>
      %182 = vector.extract_strided_slice %12 {offsets = [12, 0], sizes = [1, 16], strides = [1, 1]} : vector<16x16xf32> to vector<1x16xf32>
      %183 = vector.broadcast %181 : vector<1x16xf32> to vector<16x16xf32>
      %184 = arith.mulf %183, %11 : vector<16x16xf32>
      %185 = vector.broadcast %182 : vector<1x16xf32> to vector<16x16xf32>
      %186 = arith.mulf %185, %12 : vector<16x16xf32>
      %187 = arith.addf %184, %186 : vector<16x16xf32>
      %c192 = arith.constant 192 : index
      %c0_52 = arith.constant 0 : index
      %188 = vector.load %arg6[%c192, %c0_52] : memref<256x16xf32, #tpu.memory_space<vmem>>, vector<16x16xf32>
      tpu.vector_store %arg6[%c192, %c0_52], %187 {strides = array<i32>} : memref<256x16xf32, #tpu.memory_space<vmem>>, vector<16x16xf32>,
      %189 = vector.broadcast %182 : vector<1x16xf32> to vector<16x16xf32>
      %190 = arith.mulf %189, %11 : vector<16x16xf32>
      %191 = vector.broadcast %181 : vector<1x16xf32> to vector<16x16xf32>
      %192 = arith.mulf %191, %12 : vector<16x16xf32>
      %193 = arith.subf %190, %192 : vector<16x16xf32>
      %c192_53 = arith.constant 192 : index
      %c0_54 = arith.constant 0 : index
      %194 = vector.load %arg7[%c192_53, %c0_54] : memref<256x16xf32, #tpu.memory_space<vmem>>, vector<16x16xf32>
      tpu.vector_store %arg7[%c192_53, %c0_54], %193 {strides = array<i32>} : memref<256x16xf32, #tpu.memory_space<vmem>>, vector<16x16xf32>,
      %195 = vector.extract_strided_slice %11 {offsets = [13, 0], sizes = [1, 16], strides = [1, 1]} : vector<16x16xf32> to vector<1x16xf32>
      %196 = vector.extract_strided_slice %12 {offsets = [13, 0], sizes = [1, 16], strides = [1, 1]} : vector<16x16xf32> to vector<1x16xf32>
      %197 = vector.broadcast %195 : vector<1x16xf32> to vector<16x16xf32>
      %198 = arith.mulf %197, %11 : vector<16x16xf32>
      %199 = vector.broadcast %196 : vector<1x16xf32> to vector<16x16xf32>
      %200 = arith.mulf %199, %12 : vector<16x16xf32>
      %201 = arith.addf %198, %200 : vector<16x16xf32>
      %c208 = arith.constant 208 : index
      %c0_55 = arith.constant 0 : index
      %202 = vector.load %arg6[%c208, %c0_55] : memref<256x16xf32, #tpu.memory_space<vmem>>, vector<16x16xf32>
      tpu.vector_store %arg6[%c208, %c0_55], %201 {strides = array<i32>} : memref<256x16xf32, #tpu.memory_space<vmem>>, vector<16x16xf32>,
      %203 = vector.broadcast %196 : vector<1x16xf32> to vector<16x16xf32>
      %204 = arith.mulf %203, %11 : vector<16x16xf32>
      %205 = vector.broadcast %195 : vector<1x16xf32> to vector<16x16xf32>
      %206 = arith.mulf %205, %12 : vector<16x16xf32>
      %207 = arith.subf %204, %206 : vector<16x16xf32>
      %c208_56 = arith.constant 208 : index
      %c0_57 = arith.constant 0 : index
      %208 = vector.load %arg7[%c208_56, %c0_57] : memref<256x16xf32, #tpu.memory_space<vmem>>, vector<16x16xf32>
      tpu.vector_store %arg7[%c208_56, %c0_57], %207 {strides = array<i32>} : memref<256x16xf32, #tpu.memory_space<vmem>>, vector<16x16xf32>,
      %209 = vector.extract_strided_slice %11 {offsets = [14, 0], sizes = [1, 16], strides = [1, 1]} : vector<16x16xf32> to vector<1x16xf32>
      %210 = vector.extract_strided_slice %12 {offsets = [14, 0], sizes = [1, 16], strides = [1, 1]} : vector<16x16xf32> to vector<1x16xf32>
      %211 = vector.broadcast %209 : vector<1x16xf32> to vector<16x16xf32>
      %212 = arith.mulf %211, %11 : vector<16x16xf32>
      %213 = vector.broadcast %210 : vector<1x16xf32> to vector<16x16xf32>
      %214 = arith.mulf %213, %12 : vector<16x16xf32>
      %215 = arith.addf %212, %214 : vector<16x16xf32>
      %c224 = arith.constant 224 : index
      %c0_58 = arith.constant 0 : index
      %216 = vector.load %arg6[%c224, %c0_58] : memref<256x16xf32, #tpu.memory_space<vmem>>, vector<16x16xf32>
      tpu.vector_store %arg6[%c224, %c0_58], %215 {strides = array<i32>} : memref<256x16xf32, #tpu.memory_space<vmem>>, vector<16x16xf32>,
      %217 = vector.broadcast %210 : vector<1x16xf32> to vector<16x16xf32>
      %218 = arith.mulf %217, %11 : vector<16x16xf32>
      %219 = vector.broadcast %209 : vector<1x16xf32> to vector<16x16xf32>
      %220 = arith.mulf %219, %12 : vector<16x16xf32>
      %221 = arith.subf %218, %220 : vector<16x16xf32>
      %c224_59 = arith.constant 224 : index
      %c0_60 = arith.constant 0 : index
      %222 = vector.load %arg7[%c224_59, %c0_60] : memref<256x16xf32, #tpu.memory_space<vmem>>, vector<16x16xf32>
      tpu.vector_store %arg7[%c224_59, %c0_60], %221 {strides = array<i32>} : memref<256x16xf32, #tpu.memory_space<vmem>>, vector<16x16xf32>,
      %223 = vector.extract_strided_slice %11 {offsets = [15, 0], sizes = [1, 16], strides = [1, 1]} : vector<16x16xf32> to vector<1x16xf32>
      %224 = vector.extract_strided_slice %12 {offsets = [15, 0], sizes = [1, 16], strides = [1, 1]} : vector<16x16xf32> to vector<1x16xf32>
      %225 = vector.broadcast %223 : vector<1x16xf32> to vector<16x16xf32>
      %226 = arith.mulf %225, %11 : vector<16x16xf32>
      %227 = vector.broadcast %224 : vector<1x16xf32> to vector<16x16xf32>
      %228 = arith.mulf %227, %12 : vector<16x16xf32>
      %229 = arith.addf %226, %228 : vector<16x16xf32>
      %c240 = arith.constant 240 : index
      %c0_61 = arith.constant 0 : index
      %230 = vector.load %arg6[%c240, %c0_61] : memref<256x16xf32, #tpu.memory_space<vmem>>, vector<16x16xf32>
      tpu.vector_store %arg6[%c240, %c0_61], %229 {strides = array<i32>} : memref<256x16xf32, #tpu.memory_space<vmem>>, vector<16x16xf32>,
      %231 = vector.broadcast %224 : vector<1x16xf32> to vector<16x16xf32>
      %232 = arith.mulf %231, %11 : vector<16x16xf32>
      %233 = vector.broadcast %223 : vector<1x16xf32> to vector<16x16xf32>
      %234 = arith.mulf %233, %12 : vector<16x16xf32>
      %235 = arith.subf %232, %234 : vector<16x16xf32>
      %c240_62 = arith.constant 240 : index
      %c0_63 = arith.constant 0 : index
      %236 = vector.load %arg7[%c240_62, %c0_63] : memref<256x16xf32, #tpu.memory_space<vmem>>, vector<16x16xf32>
      tpu.vector_store %arg7[%c240_62, %c0_63], %235 {strides = array<i32>} : memref<256x16xf32, #tpu.memory_space<vmem>>, vector<16x16xf32>,
    } else {
    }
    %c0 = arith.constant 0 : index
    %c0_1 = arith.constant 0 : index
    %3 = vector.load %arg3[%c0, %c0_1] : memref<16x256xf32, #tpu.memory_space<vmem>>, vector<16x256xf32>
    %c0_2 = arith.constant 0 : index
    %c0_3 = arith.constant 0 : index
    %4 = vector.load %arg6[%c0_2, %c0_3] : memref<256x16xf32, #tpu.memory_space<vmem>>, vector<256x16xf32>
    %cst = arith.constant dense<0.000000e+00> : vector<16x16xf32>
    %5 = tpu.matmul %3, %4, %cst {dimension_numbers = #tpu.dot_dimension_numbers<[1], [0], [0], [1], [0, 0, 1, 1], [], []>} : vector<16x256xf32>, vector<256x16xf32>, vector<16x16xf32> -> vector<16x16xf32>
    %c0_4 = arith.constant 0 : index
    %c0_5 = arith.constant 0 : index
    %6 = vector.load %arg4[%c0_4, %c0_5] : memref<16x256xf32, #tpu.memory_space<vmem>>, vector<16x256xf32>
    %c0_6 = arith.constant 0 : index
    %c0_7 = arith.constant 0 : index
    %7 = vector.load %arg7[%c0_6, %c0_7] : memref<256x16xf32, #tpu.memory_space<vmem>>, vector<256x16xf32>
    %cst_8 = arith.constant dense<0.000000e+00> : vector<16x16xf32>
    %8 = tpu.matmul %6, %7, %cst_8 {dimension_numbers = #tpu.dot_dimension_numbers<[1], [0], [0], [1], [0, 0, 1, 1], [], []>} : vector<16x256xf32>, vector<256x16xf32>, vector<16x16xf32> -> vector<16x16xf32>
    %9 = arith.addf %5, %8 : vector<16x16xf32>
    %c0_9 = arith.constant 0 : index
    %c0_10 = arith.constant 0 : index
    %10 = vector.load %arg5[%c0_9, %c0_10] : memref<16x16xf32, #tpu.memory_space<vmem>>, vector<16x16xf32>
    tpu.vector_store %arg5[%c0_9, %c0_10], %9 {strides = array<i32>} : memref<16x16xf32, #tpu.memory_space<vmem>>, vector<16x16xf32>,
    return
  }
  func.func @transform_0(%arg0: i32) -> (i32, i32) {
    %c0_i32 = arith.constant 0 : i32
    %c0_i32_0 = arith.constant 0 : i32
    %c0_i32_1 = arith.constant 0 : i32
    return %c0_i32, %c0_i32_0 : i32, i32
  }
  func.func @transform_1(%arg0: i32) -> (i32, i32) {
    %c0_i32 = arith.constant 0 : i32
    %c0_i32_0 = arith.constant 0 : i32
    %c0_i32_1 = arith.constant 0 : i32
    return %c0_i32, %c0_i32_0 : i32, i32
  }
  func.func @transform_2(%arg0: i32) -> (i32, i32) {
    %c0_i32 = arith.constant 0 : i32
    %c0_i32_0 = arith.constant 0 : i32
    return %arg0, %c0_i32 : i32, i32
  }
  func.func @transform_3(%arg0: i32) -> (i32, i32) {
    %c0_i32 = arith.constant 0 : i32
    %c0_i32_0 = arith.constant 0 : i32
    return %arg0, %c0_i32 : i32, i32
  }
  func.func @transform_4(%arg0: i32) -> (i32, i32) {
    %c0_i32 = arith.constant 0 : i32
    %c0_i32_0 = arith.constant 0 : i32
    return %arg0, %c0_i32 : i32, i32
  }
}

</mosaic_0001>

<llo_original>
// kernel: tpu_custom_call.1
$region0: #{tpu_custom_call.1}
  #allocation0 [shape = 'u32[]', space=smem, size = 0x4, offset = 0x4, fixed_abs, tag = 'smem constant byte address 0x4 - core index']
  #allocation1 [shape = 'u32[144,128]{1,0:T(1,128)}', space=vmem, size = 0x12000, scoped, tag = 'internal scratch']
  #allocation2 [shape = 'f32[256,16]{1,0:T(8,128)}', space=vmem, size = 0x20000, scoped, tag = 'scratch operand']
  #allocation3 [shape = 'f32[256,16]{1,0:T(8,128)}', space=vmem, size = 0x20000, scoped, tag = 'scratch operand']
  %s0 = inlined_call_operand.hbm [shape: f32[16,16], index: 0, kind: input, shape index: {}]
  %s1 = inlined_call_operand.hbm [shape: f32[16,16], index: 1, kind: input, shape index: {}]
  %s2 = inlined_call_operand.hbm [shape: f32[16,256], index: 2, kind: input, shape index: {}]
  %s3 = inlined_call_operand.hbm [shape: f32[16,256], index: 3, kind: input, shape index: {}]
  %s4 = inlined_call_operand.hbm [shape: f32[16,16], index: 4, kind: output, shape index: {}]
  %s5 = sld [smem:[#allocation0]]
  $region46: #{tpu_custom_call.1} parent=0
    _
  %s7 = ssub.s32 1, %s5
  %s8 = scalar_select 0, %s7, %s5
  $region1: #{tpu_custom_call.1} parent=0
    #allocation4 [shape = 'u8[8192]{0}', space=vmem, size = 0x2000, scoped, tag = 'input window, operand 0, single buffered']
    #allocation5 [shape = 's32[1]{0}', space=sflag, size = 0x4, scoped, tag = 'scoped memory for tpu_custom_call.1']
    #allocation6 [shape = 's32[1]{0}', space=sflag, size = 0x4, scoped, tag = 'scoped memory for tpu_custom_call.1']
    #allocation7 [shape = 'u8[8192]{0}', space=vmem, size = 0x2000, scoped, tag = 'input window, operand 1, single buffered']
    #allocation8 [shape = 's32[1]{0}', space=sflag, size = 0x4, scoped, tag = 'scoped memory for tpu_custom_call.1']
    #allocation9 [shape = 'u8[16384]{0}', space=vmem, size = 0x4000, scoped, tag = 'input window, operand 2, single buffered']
    #allocation10 [shape = 'u8[16384]{0}', space=vmem, size = 0x4000, scoped, tag = 'input window, operand 3, single buffered']
    #allocation11 [shape = 's32[1]{0}', space=sflag, size = 0x4, scoped, tag = 'scoped memory for tpu_custom_call.1']
    #allocation12 [shape = 'u8[8192]{0}', space=vmem, size = 0x2000, scoped, tag = 'output window, operand 0, single buffered']
    %9 = vsyncpa [#allocation5], 0
    %10 = vsyncpa [#allocation8], 0
    %11 = vsyncpa [#allocation11], 0
    %12 = vsyncpa [#allocation6], 0
    // Predicated region
    $region2: #{tpu_custom_call.1} parent=1 // pred_check
      _
    $region3: #{tpu_custom_call.1} parent=1 // pred_check_branch
      %14 = sbr.rel (0) target = $region5
    $region4: #{tpu_custom_call.1} parent=1 // pred_region
      %s16 = ssub.s32 256, 256
      %17 = vsyncadd [#allocation5], %s16
      %s18 = sshll.u32 [#allocation4], 4
      %s19 = int_to_ptr.vmem [resolvable:$true] %s18
      %24 = dma.hbm_to_vmem [thread:$0]  %s0, 256, %s19, [#allocation5], 128, 128, 8
    $region5: #{tpu_custom_call.1} parent=1 // pred_fallthru
      _
    // Predicated region
    $region6: #{tpu_custom_call.1} parent=1 // pred_check
      _
    $region7: #{tpu_custom_call.1} parent=1 // pred_check_branch
      %26 = sbr.rel (0) target = $region9
    $region8: #{tpu_custom_call.1} parent=1 // pred_region
      %s28 = ssub.s32 256, 256
      %29 = vsyncadd [#allocation8], %s28
      %s30 = sshll.u32 [#allocation7], 4
      %s31 = int_to_ptr.vmem [resolvable:$true] %s30
      %36 = dma.hbm_to_vmem [thread:$0]  %s1, 256, %s31, [#allocation8], 128, 128, 8
    $region9: #{tpu_custom_call.1} parent=1 // pred_fallthru
      _
    // Predicated region
    $region10: #{tpu_custom_call.1} parent=1 // pred_check
      _
    $region11: #{tpu_custom_call.1} parent=1 // pred_check_branch
      %38 = sbr.rel (0) target = $region13
    $region12: #{tpu_custom_call.1} parent=1 // pred_region
      %s40 = ssub.s32 512, 512
      %41 = vsyncadd [#allocation8], %s40
      %s42 = sshll.u32 [#allocation9], 4
      %s43 = int_to_ptr.vmem [resolvable:$true] %s42
      %48 = dma.hbm_to_vmem [thread:$0]  %s2, 512, %s43, [#allocation8], 256, 256, 16
    $region13: #{tpu_custom_call.1} parent=1 // pred_fallthru
      _
    // Predicated region
    $region14: #{tpu_custom_call.1} parent=1 // pred_check
      _
    $region15: #{tpu_custom_call.1} parent=1 // pred_check_branch
      %50 = sbr.rel (0) target = $region17
    $region16: #{tpu_custom_call.1} parent=1 // pred_region
      %s52 = ssub.s32 512, 512
      %53 = vsyncadd [#allocation11], %s52
      %s54 = sshll.u32 [#allocation10], 4
      %s55 = int_to_ptr.vmem [resolvable:$true] %s54
      %60 = dma.hbm_to_vmem [thread:$0]  %s3, 512, %s55, [#allocation11], 256, 256, 16
    $region17: #{tpu_custom_call.1} parent=1 // pred_fallthru
      _
    // Predicated region
    $region18: #{tpu_custom_call.1} parent=1 // pred_check
      _
    $region19: #{tpu_custom_call.1} parent=1 // pred_check_branch
      %62 = sbr.rel (0) target = $region21
    $region20: #{tpu_custom_call.1} parent=1 // pred_region
      %63 = dma.done [#allocation5], 256
    $region21: #{tpu_custom_call.1} parent=1 // pred_fallthru
      _
    // Predicated region
    $region22: #{tpu_custom_call.1} parent=1 // pred_check
      _
    $region23: #{tpu_custom_call.1} parent=1 // pred_check_branch
      %65 = sbr.rel (0) target = $region25
    $region24: #{tpu_custom_call.1} parent=1 // pred_region
      %66 = dma.done [#allocation8], 256
    $region25: #{tpu_custom_call.1} parent=1 // pred_fallthru
      _
    // Predicated region
    $region26: #{tpu_custom_call.1} parent=1 // pred_check
      _
    $region27: #{tpu_custom_call.1} parent=1 // pred_check_branch
      %68 = sbr.rel (0) target = $region29
    $region28: #{tpu_custom_call.1} parent=1 // pred_region
      %69 = dma.done [#allocation8], 512
    $region29: #{tpu_custom_call.1} parent=1 // pred_fallthru
      _
    // Predicated region
    $region30: #{tpu_custom_call.1} parent=1 // pred_check
      _
    $region31: #{tpu_custom_call.1} parent=1 // pred_check_branch
      %71 = sbr.rel (0) target = $region33
    $region32: #{tpu_custom_call.1} parent=1 // pred_region
      %72 = dma.done [#allocation11], 512
    $region33: #{tpu_custom_call.1} parent=1 // pred_fallthru
      _
    %p73 = scmp.eq.s32.totalorder 0, 0
    // Predicated region
    $region34: #{tpu_custom_call.1} parent=1 // pred_check
      %p74 = pneg %p73
    $region35: #{tpu_custom_call.1} parent=1 // pred_check_branch
      %76 = sbr.rel (%p74) target = $region37
    $region36: #{tpu_custom_call.1} parent=1 // pred_region
      %v77 = vld [vmem:[#allocation4] sm:$0xff]
      %v78 = vld [vmem:[#allocation4 + $0x8] sm:$0xff]
      %v79 = vld [vmem:[#allocation7] sm:$0xff]
      %v80 = vld [vmem:[#allocation7 + $0x8] sm:$0xff]
      %v81 = vlaneseq
      %v82 = vshrl.u32 %v81, 7
      %v83 = vsub.s32 0, %v82
      %v84 = vrot.slane %v77, %v83
      %v85 = vmul.f32 %v84, %v77
      %v86 = vmul.f32 %v84, %v78
      %v87 = vlaneseq
      %v88 = vshrl.u32 %v87, 7
      %v89 = vsub.s32 0, %v88
      %v90 = vrot.slane %v79, %v89
      %v91 = vmul.f32 %v90, %v79
      %v92 = vmul.f32 %v90, %v80
      %v93 = vadd.f32 %v85, %v91
      %v94 = vadd.f32 %v86, %v92
      %vm95 = vcmask 130048
      %96 = vst.msk [vmem:[#allocation2] sm:$0xff] %vm95, %v93
      %97 = vst.msk [vmem:[#allocation2 + $0x8] sm:$0xff] %vm95, %v94
      %v98 = vmul.f32 %v90, %v77
      %v99 = vmul.f32 %v90, %v78
      %v100 = vmul.f32 %v84, %v79
      %v101 = vmul.f32 %v84, %v80
      %v102 = vsub.f32 %v98, %v100
      %v103 = vsub.f32 %v99, %v101
      %104 = vst.msk [vmem:[#allocation3] sm:$0xff] %vm95, %v102
      %105 = vst.msk [vmem:[#allocation3 + $0x8] sm:$0xff] %vm95, %v103
      %v106 = vlaneseq
      %v107 = vshrl.u32 %v106, 7
      %v108 = vsub.s32 1, %v107
      %v109 = vrot.slane %v77, %v108
      %v110 = vmul.f32 %v109, %v77
      %v111 = vmul.f32 %v109, %v78
      %v112 = vlaneseq
      %v113 = vshrl.u32 %v112, 7
      %v114 = vsub.s32 1, %v113
      %v115 = vrot.slane %v79, %v114
      %v116 = vmul.f32 %v115, %v79
      %v117 = vmul.f32 %v115, %v80
      %v118 = vadd.f32 %v110, %v116
      %v119 = vadd.f32 %v111, %v117
      %120 = vst.msk [vmem:[#allocation2 + $0x10] sm:$0xff] %vm95, %v118
      %121 = vst.msk [vmem:[#allocation2 + $0x18] sm:$0xff] %vm95, %v119
      %v122 = vmul.f32 %v115, %v77
      %v123 = vmul.f32 %v115, %v78
      %v124 = vmul.f32 %v109, %v79
      %v125 = vmul.f32 %v109, %v80
      %v126 = vsub.f32 %v122, %v124
      %v127 = vsub.f32 %v123, %v125
      %128 = vst.msk [vmem:[#allocation3 + $0x10] sm:$0xff] %vm95, %v126
      %129 = vst.msk [vmem:[#allocation3 + $0x18] sm:$0xff] %vm95, %v127
      %v130 = vlaneseq
      %v131 = vshrl.u32 %v130, 7
      %v132 = vsub.s32 2, %v131
      %v133 = vrot.slane %v77, %v132
      %v134 = vmul.f32 %v133, %v77
      %v135 = vmul.f32 %v133, %v78
      %v136 = vlaneseq
      %v137 = vshrl.u32 %v136, 7
      %v138 = vsub.s32 2, %v137
      %v139 = vrot.slane %v79, %v138
      %v140 = vmul.f32 %v139, %v79
      %v141 = vmul.f32 %v139, %v80
      %v142 = vadd.f32 %v134, %v140
      %v143 = vadd.f32 %v135, %v141
      %144 = vst.msk [vmem:[#allocation2 + $0x20] sm:$0xff] %vm95, %v142
      %145 = vst.msk [vmem:[#allocation2 + $0x28] sm:$0xff] %vm95, %v143
      %v146 = vmul.f32 %v139, %v77
      %v147 = vmul.f32 %v139, %v78
      %v148 = vmul.f32 %v133, %v79
      %v149 = vmul.f32 %v133, %v80
      %v150 = vsub.f32 %v146, %v148
      %v151 = vsub.f32 %v147, %v149
      %152 = vst.msk [vmem:[#allocation3 + $0x20] sm:$0xff] %vm95, %v150
      %153 = vst.msk [vmem:[#allocation3 + $0x28] sm:$0xff] %vm95, %v151
      %v154 = vlaneseq
      %v155 = vshrl.u32 %v154, 7
      %v156 = vsub.s32 3, %v155
      %v157 = vrot.slane %v77, %v156
      %v158 = vmul.f32 %v157, %v77
      %v159 = vmul.f32 %v157, %v78
      %v160 = vlaneseq
      %v161 = vshrl.u32 %v160, 7
      %v162 = vsub.s32 3, %v161
      %v163 = vrot.slane %v79, %v162
      %v164 = vmul.f32 %v163, %v79
      %v165 = vmul.f32 %v163, %v80
      %v166 = vadd.f32 %v158, %v164
      %v167 = vadd.f32 %v159, %v165
      %168 = vst.msk [vmem:[#allocation2 + $0x30] sm:$0xff] %vm95, %v166
      %169 = vst.msk [vmem:[#allocation2 + $0x38] sm:$0xff] %vm95, %v167
      %v170 = vmul.f32 %v163, %v77
      %v171 = vmul.f32 %v163, %v78
      %v172 = vmul.f32 %v157, %v79
      %v173 = vmul.f32 %v157, %v80
      %v174 = vsub.f32 %v170, %v172
      %v175 = vsub.f32 %v171, %v173
      %176 = vst.msk [vmem:[#allocation3 + $0x30] sm:$0xff] %vm95, %v174
      %177 = vst.msk [vmem:[#allocation3 + $0x38] sm:$0xff] %vm95, %v175
      %v178 = vlaneseq
      %v179 = vshrl.u32 %v178, 7
      %v180 = vsub.s32 4, %v179
      %v181 = vrot.slane %v77, %v180
      %v182 = vmul.f32 %v181, %v77
      %v183 = vmul.f32 %v181, %v78
      %v184 = vlaneseq
      %v185 = vshrl.u32 %v184, 7
      %v186 = vsub.s32 4, %v185
      %v187 = vrot.slane %v79, %v186
      %v188 = vmul.f32 %v187, %v79
      %v189 = vmul.f32 %v187, %v80
      %v190 = vadd.f32 %v182, %v188
      %v191 = vadd.f32 %v183, %v189
      %192 = vst.msk [vmem:[#allocation2 + $0x40] sm:$0xff] %vm95, %v190
      %193 = vst.msk [vmem:[#allocation2 + $0x48] sm:$0xff] %vm95, %v191
      %v194 = vmul.f32 %v187, %v77
      %v195 = vmul.f32 %v187, %v78
      %v196 = vmul.f32 %v181, %v79
      %v197 = vmul.f32 %v181, %v80
      %v198 = vsub.f32 %v194, %v196
      %v199 = vsub.f32 %v195, %v197
      %200 = vst.msk [vmem:[#allocation3 + $0x40] sm:$0xff] %vm95, %v198
      %201 = vst.msk [vmem:[#allocation3 + $0x48] sm:$0xff] %vm95, %v199
      %v202 = vlaneseq
      %v203 = vshrl.u32 %v202, 7
      %v204 = vsub.s32 5, %v203
      %v205 = vrot.slane %v77, %v204
      %v206 = vmul.f32 %v205, %v77
      %v207 = vmul.f32 %v205, %v78
      %v208 = vlaneseq
      %v209 = vshrl.u32 %v208, 7
      %v210 = vsub.s32 5, %v209
      %v211 = vrot.slane %v79, %v210
      %v212 = vmul.f32 %v211, %v79
      %v213 = vmul.f32 %v211, %v80
      %v214 = vadd.f32 %v206, %v212
      %v215 = vadd.f32 %v207, %v213
      %216 = vst.msk [vmem:[#allocation2 + $0x50] sm:$0xff] %vm95, %v214
      %217 = vst.msk [vmem:[#allocation2 + $0x58] sm:$0xff] %vm95, %v215
      %v218 = vmul.f32 %v211, %v77
      %v219 = vmul.f32 %v211, %v78
      %v220 = vmul.f32 %v205, %v79
      %v221 = vmul.f32 %v205, %v80
      %v222 = vsub.f32 %v218, %v220
      %v223 = vsub.f32 %v219, %v221
      %224 = vst.msk [vmem:[#allocation3 + $0x50] sm:$0xff] %vm95, %v222
      %225 = vst.msk [vmem:[#allocation3 + $0x58] sm:$0xff] %vm95, %v223
      %v226 = vlaneseq
      %v227 = vshrl.u32 %v226, 7
      %v228 = vsub.s32 6, %v227
      %v229 = vrot.slane %v77, %v228
      %v230 = vmul.f32 %v229, %v77
      %v231 = vmul.f32 %v229, %v78
      %v232 = vlaneseq
      %v233 = vshrl.u32 %v232, 7
      %v234 = vsub.s32 6, %v233
      %v235 = vrot.slane %v79, %v234
      %v236 = vmul.f32 %v235, %v79
      %v237 = vmul.f32 %v235, %v80
      %v238 = vadd.f32 %v230, %v236
      %v239 = vadd.f32 %v231, %v237
      %240 = vst.msk [vmem:[#allocation2 + $0x60] sm:$0xff] %vm95, %v238
      %241 = vst.msk [vmem:[#allocation2 + $0x68] sm:$0xff] %vm95, %v239
      %v242 = vmul.f32 %v235, %v77
      %v243 = vmul.f32 %v235, %v78
      %v244 = vmul.f32 %v229, %v79
      %v245 = vmul.f32 %v229, %v80
      %v246 = vsub.f32 %v242, %v244
      %v247 = vsub.f32 %v243, %v245
      %248 = vst.msk [vmem:[#allocation3 + $0x60] sm:$0xff] %vm95, %v246
      %249 = vst.msk [vmem:[#allocation3 + $0x68] sm:$0xff] %vm95, %v247
      %v250 = vlaneseq
      %v251 = vshrl.u32 %v250, 7
      %v252 = vsub.s32 7, %v251
      %v253 = vrot.slane %v77, %v252
      %v254 = vmul.f32 %v253, %v77
      %v255 = vmul.f32 %v253, %v78
      %v256 = vlaneseq
      %v257 = vshrl.u32 %v256, 7
      %v258 = vsub.s32 7, %v257
      %v259 = vrot.slane %v79, %v258
      %v260 = vmul.f32 %v259, %v79
      %v261 = vmul.f32 %v259, %v80
      %v262 = vadd.f32 %v254, %v260
      %v263 = vadd.f32 %v255, %v261
      %264 = vst.msk [vmem:[#allocation2 + $0x70] sm:$0xff] %vm95, %v262
      %265 = vst.msk [vmem:[#allocation2 + $0x78] sm:$0xff] %vm95, %v263
      %v266 = vmul.f32 %v259, %v77
      %v267 = vmul.f32 %v259, %v78
      %v268 = vmul.f32 %v253, %v79
      %v269 = vmul.f32 %v253, %v80
      %v270 = vsub.f32 %v266, %v268
      %v271 = vsub.f32 %v267, %v269
      %272 = vst.msk [vmem:[#allocation3 + $0x70] sm:$0xff] %vm95, %v270
      %273 = vst.msk [vmem:[#allocation3 + $0x78] sm:$0xff] %vm95, %v271
      %v274 = vlaneseq
      %v275 = vshrl.u32 %v274, 7
      %v276 = vsub.s32 0, %v275
      %v277 = vrot.slane %v78, %v276
      %v278 = vmul.f32 %v277, %v77
      %v279 = vmul.f32 %v277, %v78
      %v280 = vlaneseq
      %v281 = vshrl.u32 %v280, 7
      %v282 = vsub.s32 0, %v281
      %v283 = vrot.slane %v80, %v282
      %v284 = vmul.f32 %v283, %v79
      %v285 = vmul.f32 %v283, %v80
      %v286 = vadd.f32 %v278, %v284
      %v287 = vadd.f32 %v279, %v285
      %288 = vst.msk [vmem:[#allocation2 + $0x80] sm:$0xff] %vm95, %v286
      %289 = vst.msk [vmem:[#allocation2 + $0x88] sm:$0xff] %vm95, %v287
      %v290 = vmul.f32 %v283, %v77
      %v291 = vmul.f32 %v283, %v78
      %v292 = vmul.f32 %v277, %v79
      %v293 = vmul.f32 %v277, %v80
      %v294 = vsub.f32 %v290, %v292
      %v295 = vsub.f32 %v291, %v293
      %296 = vst.msk [vmem:[#allocation3 + $0x80] sm:$0xff] %vm95, %v294
      %297 = vst.msk [vmem:[#allocation3 + $0x88] sm:$0xff] %vm95, %v295
      %v298 = vlaneseq
      %v299 = vshrl.u32 %v298, 7
      %v300 = vsub.s32 1, %v299
      %v301 = vrot.slane %v78, %v300
      %v302 = vmul.f32 %v301, %v77
      %v303 = vmul.f32 %v301, %v78
      %v304 = vlaneseq
      %v305 = vshrl.u32 %v304, 7
      %v306 = vsub.s32 1, %v305
      %v307 = vrot.slane %v80, %v306
      %v308 = vmul.f32 %v307, %v79
      %v309 = vmul.f32 %v307, %v80
      %v310 = vadd.f32 %v302, %v308
      %v311 = vadd.f32 %v303, %v309
      %312 = vst.msk [vmem:[#allocation2 + $0x90] sm:$0xff] %vm95, %v310
      %313 = vst.msk [vmem:[#allocation2 + $0x98] sm:$0xff] %vm95, %v311
      %v314 = vmul.f32 %v307, %v77
      %v315 = vmul.f32 %v307, %v78
      %v316 = vmul.f32 %v301, %v79
      %v317 = vmul.f32 %v301, %v80
      %v318 = vsub.f32 %v314, %v316
      %v319 = vsub.f32 %v315, %v317
      %320 = vst.msk [vmem:[#allocation3 + $0x90] sm:$0xff] %vm95, %v318
      %321 = vst.msk [vmem:[#allocation3 + $0x98] sm:$0xff] %vm95, %v319
      %v322 = vlaneseq
      %v323 = vshrl.u32 %v322, 7
      %v324 = vsub.s32 2, %v323
      %v325 = vrot.slane %v78, %v324
      %v326 = vmul.f32 %v325, %v77
      %v327 = vmul.f32 %v325, %v78
      %v328 = vlaneseq
      %v329 = vshrl.u32 %v328, 7
      %v330 = vsub.s32 2, %v329
      %v331 = vrot.slane %v80, %v330
      %v332 = vmul.f32 %v331, %v79
      %v333 = vmul.f32 %v331, %v80
      %v334 = vadd.f32 %v326, %v332
      %v335 = vadd.f32 %v327, %v333
      %336 = vst.msk [vmem:[#allocation2 + $0xa0] sm:$0xff] %vm95, %v334
      %337 = vst.msk [vmem:[#allocation2 + $0xa8] sm:$0xff] %vm95, %v335
      %v338 = vmul.f32 %v331, %v77
      %v339 = vmul.f32 %v331, %v78
      %v340 = vmul.f32 %v325, %v79
      %v341 = vmul.f32 %v325, %v80
      %v342 = vsub.f32 %v338, %v340
      %v343 = vsub.f32 %v339, %v341
      %344 = vst.msk [vmem:[#allocation3 + $0xa0] sm:$0xff] %vm95, %v342
      %345 = vst.msk [vmem:[#allocation3 + $0xa8] sm:$0xff] %vm95, %v343
      %v346 = vlaneseq
      %v347 = vshrl.u32 %v346, 7
      %v348 = vsub.s32 3, %v347
      %v349 = vrot.slane %v78, %v348
      %v350 = vmul.f32 %v349, %v77
      %v351 = vmul.f32 %v349, %v78
      %v352 = vlaneseq
      %v353 = vshrl.u32 %v352, 7
      %v354 = vsub.s32 3, %v353
      %v355 = vrot.slane %v80, %v354
      %v356 = vmul.f32 %v355, %v79
      %v357 = vmul.f32 %v355, %v80
      %v358 = vadd.f32 %v350, %v356
      %v359 = vadd.f32 %v351, %v357
      %360 = vst.msk [vmem:[#allocation2 + $0xb0] sm:$0xff] %vm95, %v358
      %361 = vst.msk [vmem:[#allocation2 + $0xb8] sm:$0xff] %vm95, %v359
      %v362 = vmul.f32 %v355, %v77
      %v363 = vmul.f32 %v355, %v78
      %v364 = vmul.f32 %v349, %v79
      %v365 = vmul.f32 %v349, %v80
      %v366 = vsub.f32 %v362, %v364
      %v367 = vsub.f32 %v363, %v365
      %368 = vst.msk [vmem:[#allocation3 + $0xb0] sm:$0xff] %vm95, %v366
      %369 = vst.msk [vmem:[#allocation3 + $0xb8] sm:$0xff] %vm95, %v367
      %v370 = vlaneseq
      %v371 = vshrl.u32 %v370, 7
      %v372 = vsub.s32 4, %v371
      %v373 = vrot.slane %v78, %v372
      %v374 = vmul.f32 %v373, %v77
      %v375 = vmul.f32 %v373, %v78
      %v376 = vlaneseq
      %v377 = vshrl.u32 %v376, 7
      %v378 = vsub.s32 4, %v377
      %v379 = vrot.slane %v80, %v378
      %v380 = vmul.f32 %v379, %v79
      %v381 = vmul.f32 %v379, %v80
      %v382 = vadd.f32 %v374, %v380
      %v383 = vadd.f32 %v375, %v381
      %384 = vst.msk [vmem:[#allocation2 + $0xc0] sm:$0xff] %vm95, %v382
      %385 = vst.msk [vmem:[#allocation2 + $0xc8] sm:$0xff] %vm95, %v383
      %v386 = vmul.f32 %v379, %v77
      %v387 = vmul.f32 %v379, %v78
      %v388 = vmul.f32 %v373, %v79
      %v389 = vmul.f32 %v373, %v80
      %v390 = vsub.f32 %v386, %v388
      %v391 = vsub.f32 %v387, %v389
      %392 = vst.msk [vmem:[#allocation3 + $0xc0] sm:$0xff] %vm95, %v390
      %393 = vst.msk [vmem:[#allocation3 + $0xc8] sm:$0xff] %vm95, %v391
      %v394 = vlaneseq
      %v395 = vshrl.u32 %v394, 7
      %v396 = vsub.s32 5, %v395
      %v397 = vrot.slane %v78, %v396
      %v398 = vmul.f32 %v397, %v77
      %v399 = vmul.f32 %v397, %v78
      %v400 = vlaneseq
      %v401 = vshrl.u32 %v400, 7
      %v402 = vsub.s32 5, %v401
      %v403 = vrot.slane %v80, %v402
      %v404 = vmul.f32 %v403, %v79
      %v405 = vmul.f32 %v403, %v80
      %v406 = vadd.f32 %v398, %v404
      %v407 = vadd.f32 %v399, %v405
      %408 = vst.msk [vmem:[#allocation2 + $0xd0] sm:$0xff] %vm95, %v406
      %409 = vst.msk [vmem:[#allocation2 + $0xd8] sm:$0xff] %vm95, %v407
      %v410 = vmul.f32 %v403, %v77
      %v411 = vmul.f32 %v403, %v78
      %v412 = vmul.f32 %v397, %v79
      %v413 = vmul.f32 %v397, %v80
      %v414 = vsub.f32 %v410, %v412
      %v415 = vsub.f32 %v411, %v413
      %416 = vst.msk [vmem:[#allocation3 + $0xd0] sm:$0xff] %vm95, %v414
      %417 = vst.msk [vmem:[#allocation3 + $0xd8] sm:$0xff] %vm95, %v415
      %v418 = vlaneseq
      %v419 = vshrl.u32 %v418, 7
      %v420 = vsub.s32 6, %v419
      %v421 = vrot.slane %v78, %v420
      %v422 = vmul.f32 %v421, %v77
      %v423 = vmul.f32 %v421, %v78
      %v424 = vlaneseq
      %v425 = vshrl.u32 %v424, 7
      %v426 = vsub.s32 6, %v425
      %v427 = vrot.slane %v80, %v426
      %v428 = vmul.f32 %v427, %v79
      %v429 = vmul.f32 %v427, %v80
      %v430 = vadd.f32 %v422, %v428
      %v431 = vadd.f32 %v423, %v429
      %432 = vst.msk [vmem:[#allocation2 + $0xe0] sm:$0xff] %vm95, %v430
      %433 = vst.msk [vmem:[#allocation2 + $0xe8] sm:$0xff] %vm95, %v431
      %v434 = vmul.f32 %v427, %v77
      %v435 = vmul.f32 %v427, %v78
      %v436 = vmul.f32 %v421, %v79
      %v437 = vmul.f32 %v421, %v80
      %v438 = vsub.f32 %v434, %v436
      %v439 = vsub.f32 %v435, %v437
      %440 = vst.msk [vmem:[#allocation3 + $0xe0] sm:$0xff] %vm95, %v438
      %441 = vst.msk [vmem:[#allocation3 + $0xe8] sm:$0xff] %vm95, %v439
      %v442 = vlaneseq
      %v443 = vshrl.u32 %v442, 7
      %v444 = vsub.s32 7, %v443
      %v445 = vrot.slane %v78, %v444
      %v446 = vmul.f32 %v445, %v77
      %v447 = vmul.f32 %v445, %v78
      %v448 = vlaneseq
      %v449 = vshrl.u32 %v448, 7
      %v450 = vsub.s32 7, %v449
      %v451 = vrot.slane %v80, %v450
      %v452 = vmul.f32 %v451, %v79
      %v453 = vmul.f32 %v451, %v80
      %v454 = vadd.f32 %v446, %v452
      %v455 = vadd.f32 %v447, %v453
      %456 = vst.msk [vmem:[#allocation2 + $0xf0] sm:$0xff] %vm95, %v454
      %457 = vst.msk [vmem:[#allocation2 + $0xf8] sm:$0xff] %vm95, %v455
      %v458 = vmul.f32 %v451, %v77
      %v459 = vmul.f32 %v451, %v78
      %v460 = vmul.f32 %v445, %v79
      %v461 = vmul.f32 %v445, %v80
      %v462 = vsub.f32 %v458, %v460
      %v463 = vsub.f32 %v459, %v461
      %464 = vst.msk [vmem:[#allocation3 + $0xf0] sm:$0xff] %vm95, %v462
      %465 = vst.msk [vmem:[#allocation3 + $0xf8] sm:$0xff] %vm95, %v463
    $region37: #{tpu_custom_call.1} parent=1 // pred_fallthru
      _
    %v466 = vld [vmem:[#allocation9] sm:$0xff]
    %v467 = vld [vmem:[#allocation9 + $0x8] sm:$0xff]
    %v468 = vld [vmem:[#allocation9 + $0x10] sm:$0xff]
    %v469 = vld [vmem:[#allocation9 + $0x18] sm:$0xff]
    %v470 = vld [vmem:[#allocation2] sm:$0xff]
    %v471 = vld [vmem:[#allocation2 + $0x8] sm:$0xff]
    %v472 = vld [vmem:[#allocation2 + $0x10] sm:$0xff]
    %v473 = vld [vmem:[#allocation2 + $0x18] sm:$0xff]
    %v474 = vld [vmem:[#allocation2 + $0x20] sm:$0xff]
    %v475 = vld [vmem:[#allocation2 + $0x28] sm:$0xff]
    %v476 = vld [vmem:[#allocation2 + $0x30] sm:$0xff]
    %v477 = vld [vmem:[#allocation2 + $0x38] sm:$0xff]
    %v478 = vld [vmem:[#allocation2 + $0x40] sm:$0xff]
    %v479 = vld [vmem:[#allocation2 + $0x48] sm:$0xff]
    %v480 = vld [vmem:[#allocation2 + $0x50] sm:$0xff]
    %v481 = vld [vmem:[#allocation2 + $0x58] sm:$0xff]
    %v482 = vld [vmem:[#allocation2 + $0x60] sm:$0xff]
    %v483 = vld [vmem:[#allocation2 + $0x68] sm:$0xff]
    %v484 = vld [vmem:[#allocation2 + $0x70] sm:$0xff]
    %v485 = vld [vmem:[#allocation2 + $0x78] sm:$0xff]
    %v486 = vld [vmem:[#allocation2 + $0x80] sm:$0xff]
    %v487 = vld [vmem:[#allocation2 + $0x88] sm:$0xff]
    %v488 = vld [vmem:[#allocation2 + $0x90] sm:$0xff]
    %v489 = vld [vmem:[#allocation2 + $0x98] sm:$0xff]
    %v490 = vld [vmem:[#allocation2 + $0xa0] sm:$0xff]
    %v491 = vld [vmem:[#allocation2 + $0xa8] sm:$0xff]
    %v492 = vld [vmem:[#allocation2 + $0xb0] sm:$0xff]
    %v493 = vld [vmem:[#allocation2 + $0xb8] sm:$0xff]
    %v494 = vld [vmem:[#allocation2 + $0xc0] sm:$0xff]
    %v495 = vld [vmem:[#allocation2 + $0xc8] sm:$0xff]
    %v496 = vld [vmem:[#allocation2 + $0xd0] sm:$0xff]
    %v497 = vld [vmem:[#allocation2 + $0xd8] sm:$0xff]
    %v498 = vld [vmem:[#allocation2 + $0xe0] sm:$0xff]
    %v499 = vld [vmem:[#allocation2 + $0xe8] sm:$0xff]
    %v500 = vld [vmem:[#allocation2 + $0xf0] sm:$0xff]
    %v501 = vld [vmem:[#allocation2 + $0xf8] sm:$0xff]
    %v502 = vld [vmem:[#allocation10] sm:$0xff]
    %v503 = vld [vmem:[#allocation10 + $0x8] sm:$0xff]
    %v504 = vld [vmem:[#allocation10 + $0x10] sm:$0xff]
    %v505 = vld [vmem:[#allocation10 + $0x18] sm:$0xff]
    %v506 = vld [vmem:[#allocation3] sm:$0xff]
    %v507 = vld [vmem:[#allocation3 + $0x8] sm:$0xff]
    %v508 = vld [vmem:[#allocation3 + $0x10] sm:$0xff]
    %v509 = vld [vmem:[#allocation3 + $0x18] sm:$0xff]
    %v510 = vld [vmem:[#allocation3 + $0x20] sm:$0xff]
    %v511 = vld [vmem:[#allocation3 + $0x28] sm:$0xff]
    %v512 = vld [vmem:[#allocation3 + $0x30] sm:$0xff]
    %v513 = vld [vmem:[#allocation3 + $0x38] sm:$0xff]
    %v514 = vld [vmem:[#allocation3 + $0x40] sm:$0xff]
    %v515 = vld [vmem:[#allocation3 + $0x48] sm:$0xff]
    %v516 = vld [vmem:[#allocation3 + $0x50] sm:$0xff]
    %v517 = vld [vmem:[#allocation3 + $0x58] sm:$0xff]
    %v518 = vld [vmem:[#allocation3 + $0x60] sm:$0xff]
    %v519 = vld [vmem:[#allocation3 + $0x68] sm:$0xff]
    %v520 = vld [vmem:[#allocation3 + $0x70] sm:$0xff]
    %v521 = vld [vmem:[#allocation3 + $0x78] sm:$0xff]
    %v522 = vld [vmem:[#allocation3 + $0x80] sm:$0xff]
    %v523 = vld [vmem:[#allocation3 + $0x88] sm:$0xff]
    %v524 = vld [vmem:[#allocation3 + $0x90] sm:$0xff]
    %v525 = vld [vmem:[#allocation3 + $0x98] sm:$0xff]
    %v526 = vld [vmem:[#allocation3 + $0xa0] sm:$0xff]
    %v527 = vld [vmem:[#allocation3 + $0xa8] sm:$0xff]
    %v528 = vld [vmem:[#allocation3 + $0xb0] sm:$0xff]
    %v529 = vld [vmem:[#allocation3 + $0xb8] sm:$0xff]
    %v530 = vld [vmem:[#allocation3 + $0xc0] sm:$0xff]
    %v531 = vld [vmem:[#allocation3 + $0xc8] sm:$0xff]
    %v532 = vld [vmem:[#allocation3 + $0xd0] sm:$0xff]
    %v533 = vld [vmem:[#allocation3 + $0xd8] sm:$0xff]
    %v534 = vld [vmem:[#allocation3 + $0xe0] sm:$0xff]
    %v535 = vld [vmem:[#allocation3 + $0xe8] sm:$0xff]
    %v536 = vld [vmem:[#allocation3 + $0xf0] sm:$0xff]
    %v537 = vld [vmem:[#allocation3 + $0xf8] sm:$0xff]
    %538 = vmatprep.subr.mxu0 0.0
    %539 = vmatpush1.msra.mxu0 %v506
    %540 = vmatprep.subr.mxu0 0.0
    %541 = vmatpush1.msra.mxu0 %v507
    %542 = vmatprep.subr.mxu0 0.0
    %543 = vmatpush1.msra.mxu0 %v508
    %544 = vmatprep.subr.mxu0 0.0
    %545 = vmatpush1.msra.mxu0 %v509
    %546 = vmatprep.subr.mxu0 0.0
    %547 = vmatpush1.msra.mxu0 %v510
    %548 = vmatprep.subr.mxu0 0.0
    %549 = vmatpush1.msra.mxu0 %v511
    %550 = vmatprep.subr.mxu0 0.0
    %551 = vmatpush1.msra.mxu0 %v512
    %552 = vmatprep.subr.mxu0 0.0
    %553 = vmatpush1.msra.mxu0 %v513
    %554 = vmatprep.subr.mxu0 0.0
    %555 = vmatpush1.msra.mxu0 %v514
    %556 = vmatprep.subr.mxu0 0.0
    %557 = vmatpush1.msra.mxu0 %v515
    %558 = vmatprep.subr.mxu0 0.0
    %559 = vmatpush1.msra.mxu0 %v516
    %560 = vmatprep.subr.mxu0 0.0
    %561 = vmatpush1.msra.mxu0 %v517
    %562 = vmatprep.subr.mxu0 0.0
    %563 = vmatpush1.msra.mxu0 %v518
    %564 = vmatprep.subr.mxu0 0.0
    %565 = vmatpush1.msra.mxu0 %v519
    %566 = vmatprep.subr.mxu0 0.0
    %567 = vmatpush1.msra.mxu0 %v520
    %568 = vmatprep.subr.mxu0 0.0
    %569 = vmatpush1.msra.mxu0 %v521
    %570 = vmatprep.subr.mxu0 0.0
    %571 = vmatpush1.msra.mxu0 %v522
    %572 = vmatprep.subr.mxu0 0.0
    %573 = vmatpush1.msra.mxu0 %v523
    %574 = vmatprep.subr.mxu0 0.0
    %575 = vmatpush1.msra.mxu0 %v524
    %576 = vmatprep.subr.mxu0 0.0
    %577 = vmatpush1.msra.mxu0 %v525
    %578 = vmatprep.subr.mxu0 0.0
    %579 = vmatpush1.msra.mxu0 %v526
    %580 = vmatprep.subr.mxu0 0.0
    %581 = vmatpush1.msra.mxu0 %v527
    %582 = vmatprep.subr.mxu0 0.0
    %583 = vmatpush1.msra.mxu0 %v528
    %584 = vmatprep.subr.mxu0 0.0
    %585 = vmatpush1.msra.mxu0 %v529
    %586 = vmatprep.subr.mxu0 0.0
    %587 = vmatpush1.msra.mxu0 %v530
    %588 = vmatprep.subr.mxu0 0.0
    %589 = vmatpush1.msra.mxu0 %v531
    %590 = vmatprep.subr.mxu0 0.0
    %591 = vmatpush1.msra.mxu0 %v532
    %592 = vmatprep.subr.mxu0 0.0
    %593 = vmatpush1.msra.mxu0 %v533
    %594 = vmatprep.subr.mxu0 0.0
    %595 = vmatpush1.msra.mxu0 %v534
    %596 = vmatprep.subr.mxu0 0.0
    %597 = vmatpush1.msra.mxu0 %v535
    %598 = vmatprep.subr.mxu0 0.0
    %599 = vmatpush1.msra.mxu0 %v536
    %600 = vmatprep.subr.mxu0 0.0
    %601 = vmatpush1.msra.mxu0 %v537
    %602 = vmatprep.mubr.f32.mxu0 %v503
    %603 = vmatmul.mubr.f32.gmra.mrb[0].mxu0 %v502
    %v604 = vpop.f32.mrb[0].mxu0
    %v605 = vadd.f32 0.0, %v604
    %v606 = vpop.f32.mrb[0].mxu0
    %607 = vmatprep.mubr.f32.mxu0 %v505
    %608 = vmatmul.mubr.f32.gmra.mrb[0].mxu0 %v504
    %v609 = vpop.f32.mrb[0].mxu0
    %v610 = vadd.f32 0.0, %v609
    %v611 = vpop.f32.mrb[0].mxu0
    %612 = vdwg.mxu0
    %613 = vmatprep.subr.mxu0 0.0
    %614 = vmatpush1.msra.mxu0 %v470
    %615 = vmatprep.subr.mxu0 0.0
    %616 = vmatpush1.msra.mxu0 %v471
    %617 = vmatprep.subr.mxu0 0.0
    %618 = vmatpush1.msra.mxu0 %v472
    %619 = vmatprep.subr.mxu0 0.0
    %620 = vmatpush1.msra.mxu0 %v473
    %621 = vmatprep.subr.mxu0 0.0
    %622 = vmatpush1.msra.mxu0 %v474
    %623 = vmatprep.subr.mxu0 0.0
    %624 = vmatpush1.msra.mxu0 %v475
    %625 = vmatprep.subr.mxu0 0.0
    %626 = vmatpush1.msra.mxu0 %v476
    %627 = vmatprep.subr.mxu0 0.0
    %628 = vmatpush1.msra.mxu0 %v477
    %629 = vmatprep.subr.mxu0 0.0
    %630 = vmatpush1.msra.mxu0 %v478
    %631 = vmatprep.subr.mxu0 0.0
    %632 = vmatpush1.msra.mxu0 %v479
    %633 = vmatprep.subr.mxu0 0.0
    %634 = vmatpush1.msra.mxu0 %v480
    %635 = vmatprep.subr.mxu0 0.0
    %636 = vmatpush1.msra.mxu0 %v481
    %637 = vmatprep.subr.mxu0 0.0
    %638 = vmatpush1.msra.mxu0 %v482
    %639 = vmatprep.subr.mxu0 0.0
    %640 = vmatpush1.msra.mxu0 %v483
    %641 = vmatprep.subr.mxu0 0.0
    %642 = vmatpush1.msra.mxu0 %v484
    %643 = vmatprep.subr.mxu0 0.0
    %644 = vmatpush1.msra.mxu0 %v485
    %645 = vmatprep.subr.mxu0 0.0
    %646 = vmatpush1.msra.mxu0 %v486
    %647 = vmatprep.subr.mxu0 0.0
    %648 = vmatpush1.msra.mxu0 %v487
    %649 = vmatprep.subr.mxu0 0.0
    %650 = vmatpush1.msra.mxu0 %v488
    %651 = vmatprep.subr.mxu0 0.0
    %652 = vmatpush1.msra.mxu0 %v489
    %653 = vmatprep.subr.mxu0 0.0
    %654 = vmatpush1.msra.mxu0 %v490
    %655 = vmatprep.subr.mxu0 0.0
    %656 = vmatpush1.msra.mxu0 %v491
    %657 = vmatprep.subr.mxu0 0.0
    %658 = vmatpush1.msra.mxu0 %v492
    %659 = vmatprep.subr.mxu0 0.0
    %660 = vmatpush1.msra.mxu0 %v493
    %661 = vmatprep.subr.mxu0 0.0
    %662 = vmatpush1.msra.mxu0 %v494
    %663 = vmatprep.subr.mxu0 0.0
    %664 = vmatpush1.msra.mxu0 %v495
    %665 = vmatprep.subr.mxu0 0.0
    %666 = vmatpush1.msra.mxu0 %v496
    %667 = vmatprep.subr.mxu0 0.0
    %668 = vmatpush1.msra.mxu0 %v497
    %669 = vmatprep.subr.mxu0 0.0
    %670 = vmatpush1.msra.mxu0 %v498
    %671 = vmatprep.subr.mxu0 0.0
    %672 = vmatpush1.msra.mxu0 %v499
    %673 = vmatprep.subr.mxu0 0.0
    %674 = vmatpush1.msra.mxu0 %v500
    %675 = vmatprep.subr.mxu0 0.0
    %676 = vmatpush1.msra.mxu0 %v501
    %677 = vmatprep.mubr.f32.mxu0 %v467
    %678 = vmatmul.mubr.f32.gmra.mrb[0].mxu0 %v466
    %v679 = vpop.f32.mrb[0].mxu0
    %v680 = vadd.f32 %v605, %v679
    %v681 = vpop.f32.mrb[0].mxu0
    %682 = vmatprep.mubr.f32.mxu0 %v469
    %683 = vmatmul.mubr.f32.gmra.mrb[0].mxu0 %v468
    %v684 = vpop.f32.mrb[0].mxu0
    %v685 = vadd.f32 %v610, %v684
    %v686 = vpop.f32.mrb[0].mxu0
    %687 = vdwg.mxu0
    %vm688 = vcmask 130048
    %689 = vst.msk [vmem:[#allocation12] sm:$0xff] %vm688, %v680
    %690 = vst.msk [vmem:[#allocation12 + $0x8] sm:$0xff] %vm688, %v685
    // Predicated region
    $region38: #{tpu_custom_call.1} parent=1 // pred_check
      _
    $region39: #{tpu_custom_call.1} parent=1 // pred_check_branch
      %692 = sbr.rel (0) target = $region41
    $region40: #{tpu_custom_call.1} parent=1 // pred_region
      %s694 = ssub.s32 256, 256
      %695 = vsyncadd [#allocation6], %s694
      %s696 = sshll.u32 [#allocation12], 4
      %s697 = int_to_ptr.vmem [resolvable:$true] %s696
      %702 = dma.vmem_to_hbm [thread:$0]  %s697, 256, %s4, [#allocation6], 128, 128, 8
    $region41: #{tpu_custom_call.1} parent=1 // pred_fallthru
      _
    // Predicated region
    $region42: #{tpu_custom_call.1} parent=1 // pred_check
      _
    $region43: #{tpu_custom_call.1} parent=1 // pred_check_branch
      %704 = sbr.rel (0) target = $region45
    $region44: #{tpu_custom_call.1} parent=1 // pred_region
      %705 = dma.done [#allocation6], 256
    $region45: #{tpu_custom_call.1} parent=1 // pred_fallthru
      _
    %706 = vsyncpa [#allocation5], 1
    %707 = vsyncpa [#allocation8], 1
    %708 = vsyncpa [#allocation11], 1
    %709 = vsyncpa [#allocation6], 1

</llo_original>
